<compile_context>
chip_gen: v7x
topology: tpu7x:2x2x1
jax: 0.10.0
libtpu: 0.0.40
codegen_flags: <defaults>
</compile_context>

<pallas_src>
import jax
import jax.numpy as jnp
from jax.experimental import pallas as pl
from jax.experimental.pallas import tpu as pltpu

_EPS = 1e-08


def _pixel_norm_kernel(x_ref, o_ref):
    # Block: (1, C, TILE_HW). Reduce over channels (axis 1), normalize per pixel.
    x = x_ref[...].astype(jnp.float32)                   # f32 compute path
    mean_sq = jnp.mean(x * x, axis=1, keepdims=True)     # (1, 1, TILE_HW)
    inv = jax.lax.rsqrt(mean_sq + _EPS)                  # EUP rsqrt (free slot)
    o_ref[...] = (x * inv).astype(o_ref.dtype)


def _choose_tile_hw(hw, c, itemsize):
    """Lane-dense spatial tile sized to ~2 MiB per input block.

    The last block dim must be a multiple of 128 or the full extent.  hw that is
    not a multiple of 128 only happens for tiny spatial maps (e.g. 4x4, 8x8 in
    ProGAN), where a full-extent block is both legal and trivially small.
    """
    if hw % 128 != 0:
        return hw
    target_bytes = 2 * 1024 * 1024
    tile = (target_bytes // max(c * itemsize, 1)) // 128 * 128
    tile = max(128, min(tile, hw))
    while hw % tile != 0:  # hw is a multiple of 128, so tile=128 always divides
        tile -= 128
    return tile


def pixel_norm(x):
    """x: (N, C, H, W) -> x / sqrt(mean(x^2, dim=1, keepdim=True) + 1e-8)."""
    N, C, H, W = x.shape
    HW = H * W
    x_flat = x.reshape(N, C, HW)

    itemsize = jnp.dtype(x.dtype).itemsize
    tile_hw = _choose_tile_hw(HW, C, itemsize)
    grid = (N, HW // tile_hw)

    # Mem-bound: one read + one write of the tensor; ~3 flops/elem; one rsqrt/pixel.
    cost = pl.CostEstimate(
        flops=3 * N * C * HW,
        transcendentals=N * HW,
        bytes_accessed=2 * N * C * HW * itemsize,
    )

    out_flat = pl.pallas_call(
        _pixel_norm_kernel,
        out_shape=jax.ShapeDtypeStruct((N, C, HW), x.dtype),
        grid_spec=pltpu.PrefetchScalarGridSpec(
            num_scalar_prefetch=0,
            grid=grid,
            in_specs=[pl.BlockSpec((1, C, tile_hw), lambda n, h: (n, 0, h))],
            out_specs=pl.BlockSpec((1, C, tile_hw), lambda n, h: (n, 0, h)),
        ),
        compiler_params=pltpu.CompilerParams(
            dimension_semantics=("parallel", "parallel"),
        ),
        cost_estimate=cost,
    )(x_flat)

    return out_flat.reshape(N, C, H, W)


if __name__ == "__main__":
    key = jax.random.PRNGKey(0)
    x = jax.random.normal(key, (2, 4, 16, 16), dtype=jnp.float32)

    out = pixel_norm(x)
    out = jax.block_until_ready(out)

    # Reference check (plain JAX, same semantics as the PyTorch module).
    ref = x / jnp.sqrt(jnp.mean(x ** 2, axis=1, keepdims=True) + 1e-08)
    assert out.shape == x.shape and out.dtype == x.dtype
    assert jnp.allclose(out, ref, atol=1e-5, rtol=1e-5)

    print("KERNEL_OK")
</pallas_src>

<mosaic_0001>
module attributes {stable_mosaic.version = 11 : i64} {
  func.func @_pixel_norm_kernel(%arg0: i32, %arg1: i32, %arg2: memref<1x4x256xf32, #tpu.memory_space<vmem>>, %arg3: memref<1x4x256xf32, #tpu.memory_space<vmem>>) attributes {dimension_semantics = [#tpu.dimension_semantics<parallel>, #tpu.dimension_semantics<parallel>], iteration_bounds = array<i64: 2, 1>, scalar_prefetch = 0 : i64, scratch_operands = 0 : i64, tpu.core_type = #tpu.core_type<tc>, window_params = [{transform_indices = @transform_0, window_bounds = array<i64: 1, 4, 256>}, {transform_indices = @transform_1, window_bounds = array<i64: 1, 4, 256>}]} {
    %c0 = arith.constant 0 : index
    %c0_0 = arith.constant 0 : index
    %c0_1 = arith.constant 0 : index
    %0 = vector.load %arg2[%c0, %c0_0, %c0_1] : memref<1x4x256xf32, #tpu.memory_space<vmem>>, vector<1x4x256xf32>
    %1 = arith.mulf %0, %0 : vector<1x4x256xf32>
    %cst = arith.constant dense<0.000000e+00> : vector<1x256xf32>
    %2 = vector.multi_reduction <add>, %1, %cst [1] : vector<1x4x256xf32> to vector<1x256xf32>
    %3 = vector.shape_cast %2 : vector<1x256xf32> to vector<1x1x256xf32>
    %cst_2 = arith.constant 4.000000e+00 : f32
    %4 = vector.broadcast %cst_2 : f32 to vector<1x1x256xf32>
    %5 = arith.divf %3, %4 : vector<1x1x256xf32>
    %cst_3 = arith.constant 9.99999993E-9 : f32
    %6 = vector.broadcast %cst_3 : f32 to vector<1x1x256xf32>
    %7 = arith.addf %5, %6 : vector<1x1x256xf32>
    %8 = math.rsqrt %7 : vector<1x1x256xf32>
    %9 = vector.broadcast %8 : vector<1x1x256xf32> to vector<1x4x256xf32>
    %10 = arith.mulf %0, %9 : vector<1x4x256xf32>
    %c0_4 = arith.constant 0 : index
    %c0_5 = arith.constant 0 : index
    %c0_6 = arith.constant 0 : index
    %11 = vector.load %arg3[%c0_4, %c0_5, %c0_6] : memref<1x4x256xf32, #tpu.memory_space<vmem>>, vector<1x4x256xf32>
    tpu.vector_store %arg3[%c0_4, %c0_5, %c0_6], %10 {strides = array<i32>} : memref<1x4x256xf32, #tpu.memory_space<vmem>>, vector<1x4x256xf32>,
    return
  }
  func.func @transform_0(%arg0: i32, %arg1: i32) -> (i32, i32, i32) {
    %c0_i32 = arith.constant 0 : i32
    %c0_i32_0 = arith.constant 0 : i32
    return %arg0, %c0_i32, %arg1 : i32, i32, i32
  }
  func.func @transform_1(%arg0: i32, %arg1: i32) -> (i32, i32, i32) {
    %c0_i32 = arith.constant 0 : i32
    %c0_i32_0 = arith.constant 0 : i32
    return %arg0, %c0_i32, %arg1 : i32, i32, i32
  }
}

</mosaic_0001>

<llo_original>
// kernel: tpu_custom_call.1
$region0: #{tpu_custom_call.1}
  #allocation0 [shape = 'u32[]', space=smem, size = 0x4, offset = 0x4, fixed_abs, tag = 'smem constant byte address 0x4 - core index']
  #allocation1 [shape = 'u32[144,128]{1,0:T(1,128)}', space=vmem, size = 0x12000, scoped, tag = 'internal scratch']
  %s0 = inlined_call_operand.hbm [shape: f32[2,4,256], index: 0, kind: input, shape index: {}]
  %s1 = inlined_call_operand.hbm [shape: f32[2,4,256], index: 1, kind: output, shape index: {}]
  %s2 = sld [smem:[#allocation0]]
  $region41: #{tpu_custom_call.1} parent=0
    _
  %s4 = ssub.s32 1, %s2
  %s5 = scalar_select 0, %s4, %s2
  $region1: #{tpu_custom_call.1} parent=0
    #allocation2 [shape = 'u8[8192]{0}', space=vmem, size = 0x2000, scoped, tag = 'input window, operand 0']
    #allocation3 [shape = 's32[2]{0}', space=sflag, size = 0x8, scoped, tag = 'scoped memory for tpu_custom_call.1']
    #allocation4 [shape = 's32[2]{0}', space=sflag, size = 0x8, scoped, tag = 'scoped memory for tpu_custom_call.1']
    #allocation5 [shape = 'u8[8192]{0}', space=vmem, size = 0x2000, scoped, tag = 'output window, operand 0']
    %6 = vsyncpa [#allocation3], 0
    %s7 = scalar_lea.sflag [#allocation3], 1
    %8 = vsyncpa %s7, 0
    %9 = vsyncpa [#allocation4], 0
    %s10 = scalar_lea.sflag [#allocation4], 1
    %11 = vsyncpa %s10, 0
    loop: start=0, step=1, limit=4
    $region2: #{tpu_custom_call.1} parent=1 // loop_pre_header
      _
    $region3: #{tpu_custom_call.1} parent=1 // loop_header
      %s13 = sphi 0, %s17
      %p14 = scmp.ge.s32.totalorder %s13, 4
      %s20 = sphi 0, %s32
      %s21 = sphi 0, %s28
      %s22 = sphi 0, %s20
      %s23 = sphi 0, %s21
      %s24 = sphi 0, %s22
      %s25 = sphi 0, %s23
      %s37 = sphi 0, %s39
      %s40 = sphi 0, %s37
      %s41 = sphi 0, %s40
      %s57 = sphi 0, %s41
      %s65 = sphi 0, %s67
      %s68 = sphi 0, %s65
      %s69 = sphi 0, %s68
      %s85 = sphi 0, %s69
    $region4: #{tpu_custom_call.1} parent=1 // loop_header_branch
      %16 = sbr.rel (%p14) target = $region8
    $region5: #{tpu_custom_call.1} parent=1 // loop_body
      %s18 = ssub.s32 %s13, 1
      %s19 = ssub.s32 %s13, 2
      %s26 = sadd.s32 1, %s21
      %p27 = scmp.ge.s32.totalorder %s26, 1
      %s28 = scalar_select %p27, 0, %s26
      %s29 = sadd.s32 1, %s20
      %s30 = scalar_select %p27, %s29, %s20
      %p31 = scmp.ge.s32.totalorder %s30, 2
      %s32 = scalar_select %p31, 0, %s30
      %s33 = ssub.s32 %s20, %s32
      %s34 = ssub.s32 %s21, %s28
      %s35 = sor.u32 %s33, %s34
      %p36 = scmp.eq.s32.totalorder %s35, 0
      %s38 = sadd.s32 %s37, 1
      %s39 = scalar_select %p36, %s37, %s38
      %p42 = pneg %p36
      %p43 = scmp.eq.s32.totalorder %s13, 1
      %p44 = por %p42, %p43
      %p45 = scmp.ne.s32.totalorder %s37, %s40
      %p46 = scmp.eq.s32.totalorder %s13, 0
      %p47 = por %p45, %p46
      %p48 = scmp.ne.s32.totalorder %s37, %s40
      %p49 = scmp.eq.s32.totalorder %s18, 1
      %p50 = por %p48, %p49
      %p51 = scmp.ne.s32.totalorder %s40, %s41
      %p52 = scmp.eq.s32.totalorder %s18, 0
      %p53 = por %p51, %p52
      %p54 = scmp.ne.s32.totalorder %s40, %s41
      %p55 = scmp.eq.s32.totalorder %s19, 1
      %p56 = por %p54, %p55
      %p58 = scmp.ne.s32.totalorder %s41, %s57
      %p59 = scmp.eq.s32.totalorder %s19, 0
      %p60 = por %p58, %p59
      %s61 = ssub.s32 %s20, %s32
      %s62 = ssub.s32 %s21, %s28
      %s63 = sor.u32 %s61, %s62
      %p64 = scmp.eq.s32.totalorder %s63, 0
      %s66 = sadd.s32 %s65, 1
      %s67 = scalar_select %p64, %s65, %s66
      %p70 = pneg %p64
      %p71 = scmp.eq.s32.totalorder %s13, 1
      %p72 = por %p70, %p71
      %p73 = scmp.ne.s32.totalorder %s65, %s68
      %p74 = scmp.eq.s32.totalorder %s13, 0
      %p75 = por %p73, %p74
      %p76 = scmp.ne.s32.totalorder %s65, %s68
      %p77 = scmp.eq.s32.totalorder %s18, 1
      %p78 = por %p76, %p77
      %p79 = scmp.ne.s32.totalorder %s68, %s69
      %p80 = scmp.eq.s32.totalorder %s18, 0
      %p81 = por %p79, %p80
      %p82 = scmp.ne.s32.totalorder %s68, %s69
      %p83 = scmp.eq.s32.totalorder %s19, 1
      %p84 = por %p82, %p83
      %p86 = scmp.ne.s32.totalorder %s69, %s85
      %p87 = scmp.eq.s32.totalorder %s19, 0
      %p88 = por %p86, %p87
      %p89 = scmp.le.s32.totalorder 1, %s13
      %p90 = scmp.lt.s32.totalorder %s13, 3
      %p91 = pnand %p89, %p90
      %p92 = pneg %p91
      // Predicated region
      $region9: #{tpu_custom_call.1} parent=5 // pred_check
        _
      $region10: #{tpu_custom_call.1} parent=5 // pred_check_branch
        %94 = sbr.rel (%p91) target = $region12
      $region11: #{tpu_custom_call.1} parent=5 // pred_region
        %s95 = ssub.s32 %s13, 1
      $region12: #{tpu_custom_call.1} parent=5 // pred_fallthru
        _
      %p96 = scmp.lt.s32.totalorder %s13, 2
      // Predicated region
      $region13: #{tpu_custom_call.1} parent=5 // pred_check
        %p97 = pneg %p96
      $region14: #{tpu_custom_call.1} parent=5 // pred_check_branch
        %99 = sbr.rel (%p97) target = $region16
      $region15: #{tpu_custom_call.1} parent=5 // pred_region
        // Predicated region
        $region17: #{tpu_custom_call.1} parent=15 // pred_check
          %p100 = pneg %p47
        $region18: #{tpu_custom_call.1} parent=15 // pred_check_branch
          %102 = sbr.rel (%p100) target = $region20
        $region19: #{tpu_custom_call.1} parent=15 // pred_region
          %s103 = sand.u32 %s37, 1
          %s104 = scalar_lea.sflag [#allocation3], %s103
          %s105 = sand.u32 %s37, 1
          %s106 = smul.addr %s105, 8
          %s107 = scalar_lea.vmem [#allocation2], %s106
          %s108 = smul.u32 2, %s21
          %s110 = ssub.s32 128, 128
          %111 = vsyncadd %s104, %s110
          %s112 = smul.addr %s20, 2
          %s113 = sadd.s32 %s108, %s112
          %s114 = smul.addr %s113, 64
          %s115 = scalar_lea.hbm %s0, %s114
          %s117 = sshll.u32 %s107, 4
          %s118 = int_to_ptr.vmem [resolvable:$true] %s117
          %120 = dma.hbm_to_vmem [thread:$0]  %s115, 128, %s118, %s104
        $region20: #{tpu_custom_call.1} parent=15 // pred_fallthru
          _
      $region16: #{tpu_custom_call.1} parent=5 // pred_fallthru
        _
      %p121 = scmp.le.s32.totalorder 1, %s13
      %p122 = scmp.lt.s32.totalorder %s13, 3
      %p123 = pnand %p121, %p122
      %p124 = pneg %p123
      // Predicated region
      $region21: #{tpu_custom_call.1} parent=5 // pred_check
        _
      $region22: #{tpu_custom_call.1} parent=5 // pred_check_branch
        %126 = sbr.rel (%p123) target = $region24
      $region23: #{tpu_custom_call.1} parent=5 // pred_region
        %s127 = ssub.s32 %s13, 1
        %s128 = sand.u32 %s40, 1
        %s129 = scalar_lea.sflag [#allocation3], %s128
        %s130 = sand.u32 %s40, 1
        %s131 = smul.addr %s130, 8
        %s132 = scalar_lea.vmem [#allocation2], %s131
        // Predicated region
        $region25: #{tpu_custom_call.1} parent=23 // pred_check
          %p133 = pneg %p53
        $region26: #{tpu_custom_call.1} parent=23 // pred_check_branch
          %135 = sbr.rel (%p133) target = $region28
        $region27: #{tpu_custom_call.1} parent=23 // pred_region
          %136 = dma.done %s129, 128
        $region28: #{tpu_custom_call.1} parent=23 // pred_fallthru
          _
        %s137 = sand.u32 %s40, 1
        %s138 = scalar_lea.sflag [#allocation3], %s137
        %s139 = sand.u32 %s40, 1
        %s140 = smul.addr %s139, 8
        %s141 = scalar_lea.vmem [#allocation2], %s140
        %p142 = pneg %p53
        %p143 = pneg %p50
        %p144 = pneg %p81
        %p145 = pneg %p78
        %s146 = sand.u32 %s68, 1
        %s147 = scalar_lea.sflag [#allocation4], %s146
        %s148 = sand.u32 %s68, 1
        %s149 = smul.addr %s148, 8
        %s150 = scalar_lea.vmem [#allocation5], %s149
        %s151 = smul.u32 2, %s23
        %s152 = smul.u32 2, %s23
        %v153 = vld [vmem:[%s132] sm:$0xff]
        %v154 = vmul.f32 %v153, %v153
        %v156 = vcombine.high %v154, %v154
        %vm158 = vcmask 1043456
        %v159 = vsel %vm158, %v154, 0.0
        %v160 = vrot.slane %v159, 4
        %v161 = vadd.f32 %v159, %v160
        %v162 = vrot.slane %v161, 2
        %v163 = vadd.f32 %v161, %v162
        %v164 = vrot.slane %v163, 1
        %v165 = vadd.f32 %v163, %v164
        %v166 = vsel %vm158, %v156, 0.0
        %v167 = vrot.slane %v166, 4
        %v168 = vadd.f32 %v166, %v167
        %v169 = vrot.slane %v168, 2
        %v170 = vadd.f32 %v168, %v169
        %v171 = vrot.slane %v170, 1
        %v172 = vadd.f32 %v170, %v171
        %v173 = vrcp.pop 4.0
        %v174 = vmul.f32 %v165, %v173
        %v175 = vmul.f32 %v172, %v173
        %v176 = vadd.f32 %v174, 1e-08
        %v177 = vadd.f32 %v175, 1e-08
        %v178 = vrsqrt.pop %v176
        %v179 = vrsqrt.pop %v177
        %v182 = vcombine.low %v178, %v179
        %v184 = vmul.f32 %v153, %v182
        %185 = vst [vmem:[%s150] sm:$0xff] %v184
        %s186 = sand.u32 %s68, 1
        %s187 = scalar_lea.sflag [#allocation4], %s186
        %s188 = sand.u32 %s68, 1
        %s189 = smul.addr %s188, 8
        %s190 = scalar_lea.vmem [#allocation5], %s189
        // Predicated region
        $region29: #{tpu_custom_call.1} parent=23 // pred_check
          %p191 = pneg %p78
        $region30: #{tpu_custom_call.1} parent=23 // pred_check_branch
          %193 = sbr.rel (%p191) target = $region32
        $region31: #{tpu_custom_call.1} parent=23 // pred_region
          %s194 = smul.u32 2, %s23
          %s196 = ssub.s32 128, 128
          %197 = vsyncadd %s187, %s196
          %s198 = smul.addr %s22, 2
          %s199 = sadd.s32 %s194, %s198
          %s200 = smul.addr %s199, 64
          %s201 = scalar_lea.hbm %s1, %s200
          %s203 = sshll.u32 %s190, 4
          %s204 = int_to_ptr.vmem [resolvable:$true] %s203
          %206 = dma.vmem_to_hbm [thread:$0]  %s204, 128, %s201, %s187
        $region32: #{tpu_custom_call.1} parent=23 // pred_fallthru
          _
      $region24: #{tpu_custom_call.1} parent=5 // pred_fallthru
        _
      %p207 = scmp.le.s32.totalorder 2, %s13
      // Predicated region
      $region33: #{tpu_custom_call.1} parent=5 // pred_check
        %p208 = pneg %p207
      $region34: #{tpu_custom_call.1} parent=5 // pred_check_branch
        %210 = sbr.rel (%p208) target = $region36
      $region35: #{tpu_custom_call.1} parent=5 // pred_region
        %s211 = ssub.s32 %s13, 2
        // Predicated region
        $region37: #{tpu_custom_call.1} parent=35 // pred_check
          %p212 = pneg %p84
        $region38: #{tpu_custom_call.1} parent=35 // pred_check_branch
          %214 = sbr.rel (%p212) target = $region40
        $region39: #{tpu_custom_call.1} parent=35 // pred_region
          %s215 = sand.u32 %s69, 1
          %s216 = scalar_lea.sflag [#allocation4], %s215
          %s217 = sand.u32 %s69, 1
          %s218 = smul.addr %s217, 8
          %s219 = scalar_lea.vmem [#allocation5], %s218
          %220 = dma.done %s216, 128
        $region40: #{tpu_custom_call.1} parent=35 // pred_fallthru
          _
      $region36: #{tpu_custom_call.1} parent=5 // pred_fallthru
        _
    $region6: #{tpu_custom_call.1} parent=1 // loop_footer
      %s17 = sadd.s32 1, %s13
    $region7: #{tpu_custom_call.1} parent=1 // loop_footer_branch
      %12 = sbr.rel target = $region3
    $region8: #{tpu_custom_call.1} parent=1 // loop_exit
      _
    %221 = vsyncpa [#allocation3], 1
    %s222 = scalar_lea.sflag [#allocation3], 1
    %223 = vsyncpa %s222, 1
    %224 = vsyncpa [#allocation4], 1
    %s225 = scalar_lea.sflag [#allocation4], 1
    %226 = vsyncpa %s225, 1

</llo_original>
